<compile_context>
chip_gen: v6e
topology: v6e:2x2x1
jax: 0.10.0
libtpu: 0.0.40
codegen_flags: <defaults>
</compile_context>

<pallas_src>
import math

import jax
import jax.numpy as jnp
from jax import lax
from jax.experimental import pallas as pl
from jax.experimental.pallas import tpu as pltpu


def _round_up(x: int, m: int) -> int:
    return ((x + m - 1) // m) * m


def _pick_tile(size: int, max_tile: int) -> int:
    """Largest multiple of 128 that divides `size` and is <= max_tile."""
    best = 128
    t = 128
    while t <= min(max_tile, size):
        if size % t == 0:
            best = t
        t += 128
    return best


def _vmem_limit_bytes(per_step_bytes: int) -> int:
    """Generation-aware scoped-VMEM limit: >= double-buffered need, <= ~3/4 cap."""
    need = 2 * per_step_bytes + (2 << 20)          # double buffers + headroom
    try:
        cap = int(pltpu.get_tpu_info().vmem_capacity_bytes)
    except Exception:                              # pragma: no cover - fallback
        cap = 64 << 20
    soft_cap = (3 * cap) // 4                      # leave room for compiler scratch
    return int(max(min(max(need, 16 << 20), soft_cap), need))


# --------------------------------------------------------------------------
# Stage 1: combine = X @ W^T   (F.linear)
# --------------------------------------------------------------------------
def _combine_resident_kernel(x_ref, w_ref, c_ref):
    # NT-form matmul: contract last dim of x with last dim of w (== x @ w.T)
    c_ref[...] = lax.dot_general(
        x_ref[...], w_ref[...],
        dimension_numbers=(((1,), (1,)), ((), ())),
        preferred_element_type=jnp.float32,
    ).astype(c_ref.dtype)


def _combine_ktiled_kernel(x_ref, w_ref, c_ref, acc_ref):
    # K-tiled reduction over the contraction dim; f32 accumulator in VMEM.
    @pl.when(pl.program_id(1) == 0)
    def _():
        acc_ref[...] = jnp.zeros_like(acc_ref)

    acc_ref[...] += lax.dot_general(
        x_ref[...], w_ref[...],
        dimension_numbers=(((1,), (1,)), ((), ())),
        preferred_element_type=jnp.float32,
    )

    @pl.when(pl.program_id(1) == pl.num_programs(1) - 1)
    def _():
        c_ref[...] = acc_ref[...].astype(c_ref.dtype)


# --------------------------------------------------------------------------
# Stage 2: adj[i,j] tile = sigmoid(C_i @ C_j^T), 2-D output-tiled grid.
# --------------------------------------------------------------------------
def _adj_kernel(ci_ref, cj_ref, adj_ref):
    logits = lax.dot_general(
        ci_ref[...], cj_ref[...],
        dimension_numbers=(((1,), (1,)), ((), ())),
        preferred_element_type=jnp.float32,
    )
    # sigmoid(x) == 0.5*tanh(0.5*x) + 0.5 : transcendental goes to the EUP.
    adj_ref[...] = (0.5 * jnp.tanh(0.5 * logits) + 0.5).astype(adj_ref.dtype)


def decoder_forward(node_embed: jax.Array, de_weight: jax.Array, *,
                    combine_dtype=jnp.bfloat16,
                    row_tile: int = 256,
                    adj_tile: int = 512,
                    k_tile_threshold: int = 1024) -> jax.Array:
    """node_embed: (N, D), de_weight: (D, D) -> adjacency (N, N), f32."""
    n, d = node_embed.shape
    assert de_weight.shape == (d, d)

    csz = jnp.dtype(combine_dtype).itemsize

    # Lane-dense padding: D and N each to a multiple of 128 only.
    d_pad = _round_up(d, 128)
    n_pad = _round_up(n, 128)
    tm1 = _pick_tile(n_pad, row_tile)      # stage-1 row tile
    tm2 = _pick_tile(n_pad, adj_tile)      # stage-2 adjacency tile (rows & cols)

    x_p = jnp.pad(node_embed.astype(jnp.float32),
                  ((0, n_pad - n), (0, d_pad - d)))
    w_p = jnp.pad(de_weight.astype(jnp.float32),
                  ((0, d_pad - d), (0, d_pad - d)))

    # ---------------- stage 1: combine = X @ W^T ----------------
    s1_bytes_accessed = int(4 * n_pad * d_pad
                            + 4 * d_pad * d_pad * (n_pad // tm1)
                            + csz * n_pad * d_pad)
    if d_pad <= k_tile_threshold:
        # Whole W resident per tile (cheap for small/medium D).
        s1_step = 4 * tm1 * d_pad + 4 * d_pad * d_pad + csz * tm1 * d_pad
        combine = pl.pallas_call(
            _combine_resident_kernel,
            out_shape=jax.ShapeDtypeStruct((n_pad, d_pad), combine_dtype),
            grid_spec=pltpu.PrefetchScalarGridSpec(
                num_scalar_prefetch=0,
                grid=(n_pad // tm1,),
                in_specs=[
                    pl.BlockSpec((tm1, d_pad), lambda i: (i, 0)),
                    pl.BlockSpec((d_pad, d_pad), lambda i: (0, 0)),  # W resident
                ],
                out_specs=pl.BlockSpec((tm1, d_pad), lambda i: (i, 0)),
            ),
            compiler_params=pltpu.CompilerParams(
                dimension_semantics=("parallel",),
                vmem_limit_bytes=_vmem_limit_bytes(s1_step),
            ),
            cost_estimate=pl.CostEstimate(
                flops=2 * n_pad * d_pad * d_pad,
                transcendentals=0,
                bytes_accessed=s1_bytes_accessed,
            ),
        )(x_p, w_p)
    else:
        # Large D: K-tiled reduction so W never has to be fully VMEM-resident.
        tk = _pick_tile(d_pad, 512)
        s1_step = (4 * tm1 * tk + 4 * d_pad * tk
                   + csz * tm1 * d_pad + 4 * tm1 * d_pad)
        combine = pl.pallas_call(
            _combine_ktiled_kernel,
            out_shape=jax.ShapeDtypeStruct((n_pad, d_pad), combine_dtype),
            grid_spec=pltpu.PrefetchScalarGridSpec(
                num_scalar_prefetch=0,
                grid=(n_pad // tm1, d_pad // tk),
                in_specs=[
                    pl.BlockSpec((tm1, tk), lambda i, k: (i, k)),
                    pl.BlockSpec((d_pad, tk), lambda i, k: (0, k)),
                ],
                out_specs=pl.BlockSpec((tm1, d_pad), lambda i, k: (i, 0)),
                scratch_shapes=[pltpu.VMEM((tm1, d_pad), jnp.float32)],
            ),
            compiler_params=pltpu.CompilerParams(
                dimension_semantics=("parallel", "arbitrary"),
                vmem_limit_bytes=_vmem_limit_bytes(s1_step),
            ),
            cost_estimate=pl.CostEstimate(
                flops=2 * n_pad * d_pad * d_pad,
                transcendentals=0,
                bytes_accessed=s1_bytes_accessed,
            ),
        )(x_p, w_p)

    # ---------------- stage 2: adj = sigmoid(C @ C^T) ----------------
    n_tiles = n_pad // tm2
    s2_step = 2 * csz * tm2 * d_pad + 4 * tm2 * tm2
    adj_p = pl.pallas_call(
        _adj_kernel,
        out_shape=jax.ShapeDtypeStruct((n_pad, n_pad), jnp.float32),
        grid_spec=pltpu.PrefetchScalarGridSpec(
            num_scalar_prefetch=0,
            grid=(n_tiles, n_tiles),
            in_specs=[
                pl.BlockSpec((tm2, d_pad), lambda i, j: (i, 0)),  # C row tile
                pl.BlockSpec((tm2, d_pad), lambda i, j: (j, 0)),  # C col tile
            ],
            out_specs=pl.BlockSpec((tm2, tm2), lambda i, j: (i, j)),
        ),
        compiler_params=pltpu.CompilerParams(
            dimension_semantics=("parallel", "parallel"),
            vmem_limit_bytes=_vmem_limit_bytes(s2_step),
        ),
        cost_estimate=pl.CostEstimate(
            flops=2 * n_pad * n_pad * d_pad,
            transcendentals=n_pad * n_pad,
            # includes the n_tiles re-reads of C per axis
            bytes_accessed=int(2 * csz * n_tiles * n_pad * d_pad
                               + 4 * n_pad * n_pad),
        ),
    )(combine, combine)

    if n_pad == n:
        return adj_p
    return adj_p[:n, :n]


def init_de_weight(key, nembed: int) -> jax.Array:
    """Matches Decoder.reset_parameters: uniform(-stdv, stdv), stdv=1/sqrt(nembed)."""
    stdv = 1.0 / math.sqrt(nembed)
    return jax.random.uniform(
        key, (nembed, nembed), dtype=jnp.float32, minval=-stdv, maxval=stdv)


def _reference(node_embed, de_weight):
    combine = node_embed @ de_weight.T
    return jax.nn.sigmoid(combine @ combine.T)


if __name__ == "__main__":
    key = jax.random.PRNGKey(0)
    k_x, k_w, k_x2, k_w2 = jax.random.split(key, 4)

    # Small toy-graph shape consistent with the module.
    N, NEMBED = 16, 32
    node_embed = jax.random.normal(k_x, (N, NEMBED), dtype=jnp.float32)
    de_weight = init_de_weight(k_w, NEMBED)
    ref = _reference(node_embed, de_weight)

    # Exact-parity path (f32 combine) — matches the PyTorch module numerics.
    adj_f32 = jax.block_until_ready(
        decoder_forward(node_embed, de_weight, combine_dtype=jnp.float32))
    assert adj_f32.shape == (N, N)
    assert jnp.allclose(adj_f32, ref, atol=1e-5, rtol=1e-5)

    # Default perf path (bf16 combine, f32 logits/sigmoid/output).
    adj_bf16 = jax.block_until_ready(decoder_forward(node_embed, de_weight))
    assert adj_bf16.shape == (N, N)
    assert jnp.allclose(adj_bf16, ref, atol=3e-2, rtol=3e-2)

    # Non-aligned shapes: multi-tile grids, padding, and the K-tiled stage 1.
    N2, D2 = 300, 96
    x2 = jax.random.normal(k_x2, (N2, D2), dtype=jnp.float32)
    w2 = init_de_weight(k_w2, D2)
    ref2 = _reference(x2, w2)
    adj2 = jax.block_until_ready(
        decoder_forward(x2, w2, k_tile_threshold=0))   # force K-tiled stage 1
    assert adj2.shape == (N2, N2)
    assert jnp.allclose(adj2, ref2, atol=3e-2, rtol=3e-2)

    print("KERNEL_OK")
</pallas_src>

<mosaic_0001>
module attributes {stable_mosaic.version = 11 : i64} {
  func.func @_combine_resident_kernel(%arg0: i32, %arg1: memref<128x128xf32, #tpu.memory_space<vmem>>, %arg2: memref<128x128xf32, #tpu.memory_space<vmem>>, %arg3: memref<128x128xf32, #tpu.memory_space<vmem>>) attributes {dimension_semantics = [#tpu.dimension_semantics<parallel>], iteration_bounds = array<i64: 1>, scalar_prefetch = 0 : i64, scratch_operands = 0 : i64, tpu.core_type = #tpu.core_type<tc>, window_params = [{transform_indices = @transform_0, window_bounds = array<i64: 128, 128>}, {pipeline_mode = #tpu.pipeline_mode<synchronous>, transform_indices = @transform_1, window_bounds = array<i64: 128, 128>}, {transform_indices = @transform_2, window_bounds = array<i64: 128, 128>}]} {
    %c0 = arith.constant 0 : index
    %c0_0 = arith.constant 0 : index
    %0 = vector.load %arg1[%c0, %c0_0] : memref<128x128xf32, #tpu.memory_space<vmem>>, vector<128x128xf32>
    %c0_1 = arith.constant 0 : index
    %c0_2 = arith.constant 0 : index
    %1 = vector.load %arg2[%c0_1, %c0_2] : memref<128x128xf32, #tpu.memory_space<vmem>>, vector<128x128xf32>
    %cst = arith.constant dense<0.000000e+00> : vector<128x128xf32>
    %2 = tpu.matmul %0, %1, %cst {dimension_numbers = #tpu.dot_dimension_numbers<[1], [1], [0], [0], [0, 0, 1, 0], [], []>} : vector<128x128xf32>, vector<128x128xf32>, vector<128x128xf32> -> vector<128x128xf32>
    %c0_3 = arith.constant 0 : index
    %c0_4 = arith.constant 0 : index
    %3 = vector.load %arg3[%c0_3, %c0_4] : memref<128x128xf32, #tpu.memory_space<vmem>>, vector<128x128xf32>
    tpu.vector_store %arg3[%c0_3, %c0_4], %2 {strides = array<i32>} : memref<128x128xf32, #tpu.memory_space<vmem>>, vector<128x128xf32>,
    return
  }
  func.func @transform_0(%arg0: i32) -> (i32, i32) {
    %c0_i32 = arith.constant 0 : i32
    %c0_i32_0 = arith.constant 0 : i32
    return %arg0, %c0_i32 : i32, i32
  }
  func.func @transform_1(%arg0: i32) -> (i32, i32) {
    %c0_i32 = arith.constant 0 : i32
    %c0_i32_0 = arith.constant 0 : i32
    %c0_i32_1 = arith.constant 0 : i32
    return %c0_i32, %c0_i32_0 : i32, i32
  }
  func.func @transform_2(%arg0: i32) -> (i32, i32) {
    %c0_i32 = arith.constant 0 : i32
    %c0_i32_0 = arith.constant 0 : i32
    return %arg0, %c0_i32 : i32, i32
  }
}

</mosaic_0001>

<llo_original>
// kernel: tpu_custom_call.1
$region0: #{tpu_custom_call.1}
  #allocation0 [shape = 'u32[]', space=smem, size = 0x4, offset = 0x4, fixed_abs, tag = 'smem constant byte address 0x4 - core index']
  #allocation1 [shape = 'u32[144,128]{1,0:T(1,128)}', space=vmem, size = 0x12000, scoped, tag = 'internal scratch']
  %s0 = inlined_call_operand.hbm [shape: f32[128,128], index: 0, kind: input, shape index: {}]
  %s1 = inlined_call_operand.hbm [shape: f32[128,128], index: 1, kind: input, shape index: {}]
  %s2 = inlined_call_operand.hbm [shape: f32[128,128], index: 2, kind: output, shape index: {}]
  %s3 = sld [smem:[#allocation0]]
  $region26: #{tpu_custom_call.1} parent=0
    _
  %s5 = ssub.s32 1, %s3
  %s6 = scalar_select 0, %s5, %s3
  $region1: #{tpu_custom_call.1} parent=0
    #allocation2 [shape = 'u8[65536]{0}', space=vmem, size = 0x10000, scoped, tag = 'input window, operand 0, single buffered']
    #allocation3 [shape = 's32[1]{0}', space=sflag, size = 0x4, scoped, tag = 'scoped memory for tpu_custom_call.1']
    #allocation4 [shape = 's32[1]{0}', space=sflag, size = 0x4, scoped, tag = 'scoped memory for tpu_custom_call.1']
    #allocation5 [shape = 'u8[65536]{0}', space=vmem, size = 0x10000, scoped, tag = 'input window, operand 1, single buffered']
    #allocation6 [shape = 's32[1]{0}', space=sflag, size = 0x4, scoped, tag = 'scoped memory for tpu_custom_call.1']
    #allocation7 [shape = 'u8[65536]{0}', space=vmem, size = 0x10000, scoped, tag = 'output window, operand 0, single buffered']
    %7 = vsyncpa [#allocation3], 0
    %8 = vsyncpa [#allocation6], 0
    %9 = vsyncpa [#allocation4], 0
    // Predicated region
    $region2: #{tpu_custom_call.1} parent=1 // pred_check
      _
    $region3: #{tpu_custom_call.1} parent=1 // pred_check_branch
      %11 = sbr.rel (0) target = $region5
    $region4: #{tpu_custom_call.1} parent=1 // pred_region
      %s13 = ssub.s32 2048, 2048
      %14 = vsyncadd [#allocation3], %s13
      %s15 = sshll.u32 [#allocation2], 4
      %s16 = int_to_ptr.vmem [resolvable:$true] %s15
      %21 = dma.hbm_to_vmem [thread:$0]  %s0, 2048, %s16, [#allocation3], 128, 128, 8
    $region5: #{tpu_custom_call.1} parent=1 // pred_fallthru
      _
    // Predicated region
    $region6: #{tpu_custom_call.1} parent=1 // pred_check
      _
    $region7: #{tpu_custom_call.1} parent=1 // pred_check_branch
      %23 = sbr.rel (0) target = $region9
    $region8: #{tpu_custom_call.1} parent=1 // pred_region
      %s25 = ssub.s32 2048, 2048
      %26 = vsyncadd [#allocation6], %s25
      %s27 = sshll.u32 [#allocation5], 4
      %s28 = int_to_ptr.vmem [resolvable:$true] %s27
      %33 = dma.hbm_to_vmem [thread:$0]  %s1, 2048, %s28, [#allocation6], 128, 128, 8
    $region9: #{tpu_custom_call.1} parent=1 // pred_fallthru
      _
    // Predicated region
    $region10: #{tpu_custom_call.1} parent=1 // pred_check
      _
    $region11: #{tpu_custom_call.1} parent=1 // pred_check_branch
      %35 = sbr.rel (0) target = $region13
    $region12: #{tpu_custom_call.1} parent=1 // pred_region
      %36 = dma.done [#allocation3], 2048
    $region13: #{tpu_custom_call.1} parent=1 // pred_fallthru
      _
    // Predicated region
    $region14: #{tpu_custom_call.1} parent=1 // pred_check
      _
    $region15: #{tpu_custom_call.1} parent=1 // pred_check_branch
      %38 = sbr.rel (0) target = $region17
    $region16: #{tpu_custom_call.1} parent=1 // pred_region
      %39 = dma.done [#allocation6], 2048
    $region17: #{tpu_custom_call.1} parent=1 // pred_fallthru
      _
    %v40 = vld [vmem:[#allocation2] sm:$0xff]
    %v41 = vld [vmem:[#allocation2 + $0x8] sm:$0xff]
    %v42 = vld [vmem:[#allocation2 + $0x10] sm:$0xff]
    %v43 = vld [vmem:[#allocation2 + $0x18] sm:$0xff]
    %v44 = vld [vmem:[#allocation2 + $0x20] sm:$0xff]
    %v45 = vld [vmem:[#allocation2 + $0x28] sm:$0xff]
    %v46 = vld [vmem:[#allocation2 + $0x30] sm:$0xff]
    %v47 = vld [vmem:[#allocation2 + $0x38] sm:$0xff]
    %v48 = vld [vmem:[#allocation2 + $0x40] sm:$0xff]
    %v49 = vld [vmem:[#allocation2 + $0x48] sm:$0xff]
    %v50 = vld [vmem:[#allocation2 + $0x50] sm:$0xff]
    %v51 = vld [vmem:[#allocation2 + $0x58] sm:$0xff]
    %v52 = vld [vmem:[#allocation2 + $0x60] sm:$0xff]
    %v53 = vld [vmem:[#allocation2 + $0x68] sm:$0xff]
    %v54 = vld [vmem:[#allocation2 + $0x70] sm:$0xff]
    %v55 = vld [vmem:[#allocation2 + $0x78] sm:$0xff]
    %v56 = vld [vmem:[#allocation5] sm:$0xff]
    %v57 = vld [vmem:[#allocation5 + $0x8] sm:$0xff]
    %v58 = vld [vmem:[#allocation5 + $0x10] sm:$0xff]
    %v59 = vld [vmem:[#allocation5 + $0x18] sm:$0xff]
    %v60 = vld [vmem:[#allocation5 + $0x20] sm:$0xff]
    %v61 = vld [vmem:[#allocation5 + $0x28] sm:$0xff]
    %v62 = vld [vmem:[#allocation5 + $0x30] sm:$0xff]
    %v63 = vld [vmem:[#allocation5 + $0x38] sm:$0xff]
    %v64 = vld [vmem:[#allocation5 + $0x40] sm:$0xff]
    %v65 = vld [vmem:[#allocation5 + $0x48] sm:$0xff]
    %v66 = vld [vmem:[#allocation5 + $0x50] sm:$0xff]
    %v67 = vld [vmem:[#allocation5 + $0x58] sm:$0xff]
    %v68 = vld [vmem:[#allocation5 + $0x60] sm:$0xff]
    %v69 = vld [vmem:[#allocation5 + $0x68] sm:$0xff]
    %v70 = vld [vmem:[#allocation5 + $0x70] sm:$0xff]
    %v71 = vld [vmem:[#allocation5 + $0x78] sm:$0xff]
    %72 = vmatprep.subr.mxu0 0.0
    %73 = vmatpush1.xpose.msra.mxu0 %v71
    %74 = vmatprep.subr.mxu0 0.0
    %75 = vmatpush1.xpose.msra.mxu0 %v70
    %76 = vmatprep.subr.mxu0 0.0
    %77 = vmatpush1.xpose.msra.mxu0 %v69
    %78 = vmatprep.subr.mxu0 0.0
    %79 = vmatpush1.xpose.msra.mxu0 %v68
    %80 = vmatprep.subr.mxu0 0.0
    %81 = vmatpush1.xpose.msra.mxu0 %v67
    %82 = vmatprep.subr.mxu0 0.0
    %83 = vmatpush1.xpose.msra.mxu0 %v66
    %84 = vmatprep.subr.mxu0 0.0
    %85 = vmatpush1.xpose.msra.mxu0 %v65
    %86 = vmatprep.subr.mxu0 0.0
    %87 = vmatpush1.xpose.msra.mxu0 %v64
    %88 = vmatprep.subr.mxu0 0.0
    %89 = vmatpush1.xpose.msra.mxu0 %v63
    %90 = vmatprep.subr.mxu0 0.0
    %91 = vmatpush1.xpose.msra.mxu0 %v62
    %92 = vmatprep.subr.mxu0 0.0
    %93 = vmatpush1.xpose.msra.mxu0 %v61
    %94 = vmatprep.subr.mxu0 0.0
    %95 = vmatpush1.xpose.msra.mxu0 %v60
    %96 = vmatprep.subr.mxu0 0.0
    %97 = vmatpush1.xpose.msra.mxu0 %v59
    %98 = vmatprep.subr.mxu0 0.0
    %99 = vmatpush1.xpose.msra.mxu0 %v58
    %100 = vmatprep.subr.mxu0 0.0
    %101 = vmatpush1.xpose.msra.mxu0 %v57
    %102 = vmatprep.subr.mxu0 0.0
    %103 = vmatpush1.xpose.msra.mxu0 %v56
    %104 = vmatprep.subr.mxu0 0.0
    %105 = vmatpush2.xpose.msra.mxu0 0.0
    %106 = vmatprep.subr.mxu0 0.0
    %107 = vmatpush2.xpose.msra.mxu0 0.0
    %108 = vmatprep.subr.mxu0 0.0
    %109 = vmatpush2.xpose.msra.mxu0 0.0
    %110 = vmatprep.subr.mxu0 0.0
    %111 = vmatpush2.xpose.msra.mxu0 0.0
    %112 = vmatprep.subr.mxu0 0.0
    %113 = vmatpush2.xpose.msra.mxu0 0.0
    %114 = vmatprep.subr.mxu0 0.0
    %115 = vmatpush2.xpose.msra.mxu0 0.0
    %116 = vmatprep.subr.mxu0 0.0
    %117 = vmatpush2.xpose.msra.mxu0 0.0
    %118 = vmatprep.subr.mxu0 0.0
    %119 = vmatpush2.xpose.msra.mxu0 0.0
    %120 = vmatprep.subr.mxu0 0.0
    %121 = vmatpush2.xpose.msra.mxu0 0.0
    %122 = vmatprep.subr.mxu0 0.0
    %123 = vmatpush2.xpose.msra.mxu0 0.0
    %124 = vmatprep.subr.mxu0 0.0
    %125 = vmatpush2.xpose.msra.mxu0 0.0
    %126 = vmatprep.subr.mxu0 0.0
    %127 = vmatpush2.xpose.msra.mxu0 0.0
    %128 = vmatprep.subr.mxu0 0.0
    %129 = vmatpush2.xpose.msra.mxu0 0.0
    %130 = vmatprep.subr.mxu0 0.0
    %131 = vmatpush2.xpose.msra.mxu0 0.0
    %132 = vmatprep.subr.mxu0 0.0
    %133 = vmatpush2.xpose.msra.mxu0 0.0
    %134 = vmatprep.subr.mxu0 0.0
    %135 = vmatpush2.xpose.msra.mxu0 0.0
    %136 = vmatprep.mubr.f32.mxu0 0.0
    %137 = vmatmul.mubr.f32.gmra.mxu0 %v40
    %v138 = vpop.f32.mrf.mxu0
    %v139 = vadd.f32 0.0, %v138
    %v140 = vpop.f32.mrf.mxu0
    %141 = vmatprep.mubr.f32.mxu0 0.0
    %142 = vmatmul.mubr.f32.gmra.mxu0 %v41
    %v143 = vpop.f32.mrf.mxu0
    %v144 = vadd.f32 0.0, %v143
    %v145 = vpop.f32.mrf.mxu0
    %146 = vmatprep.mubr.f32.mxu0 0.0
    %147 = vmatmul.mubr.f32.gmra.mxu0 %v42
    %v148 = vpop.f32.mrf.mxu0
    %v149 = vadd.f32 0.0, %v148
    %v150 = vpop.f32.mrf.mxu0
    %151 = vmatprep.mubr.f32.mxu0 0.0
    %152 = vmatmul.mubr.f32.gmra.mxu0 %v43
    %v153 = vpop.f32.mrf.mxu0
    %v154 = vadd.f32 0.0, %v153
    %v155 = vpop.f32.mrf.mxu0
    %156 = vmatprep.mubr.f32.mxu0 0.0
    %157 = vmatmul.mubr.f32.gmra.mxu0 %v44
    %v158 = vpop.f32.mrf.mxu0
    %v159 = vadd.f32 0.0, %v158
    %v160 = vpop.f32.mrf.mxu0
    %161 = vmatprep.mubr.f32.mxu0 0.0
    %162 = vmatmul.mubr.f32.gmra.mxu0 %v45
    %v163 = vpop.f32.mrf.mxu0
    %v164 = vadd.f32 0.0, %v163
    %v165 = vpop.f32.mrf.mxu0
    %166 = vmatprep.mubr.f32.mxu0 0.0
    %167 = vmatmul.mubr.f32.gmra.mxu0 %v46
    %v168 = vpop.f32.mrf.mxu0
    %v169 = vadd.f32 0.0, %v168
    %v170 = vpop.f32.mrf.mxu0
    %171 = vmatprep.mubr.f32.mxu0 0.0
    %172 = vmatmul.mubr.f32.gmra.mxu0 %v47
    %v173 = vpop.f32.mrf.mxu0
    %v174 = vadd.f32 0.0, %v173
    %v175 = vpop.f32.mrf.mxu0
    %176 = vmatprep.mubr.f32.mxu0 0.0
    %177 = vmatmul.mubr.f32.gmra.mxu0 %v48
    %v178 = vpop.f32.mrf.mxu0
    %v179 = vadd.f32 0.0, %v178
    %v180 = vpop.f32.mrf.mxu0
    %181 = vmatprep.mubr.f32.mxu0 0.0
    %182 = vmatmul.mubr.f32.gmra.mxu0 %v49
    %v183 = vpop.f32.mrf.mxu0
    %v184 = vadd.f32 0.0, %v183
    %v185 = vpop.f32.mrf.mxu0
    %186 = vmatprep.mubr.f32.mxu0 0.0
    %187 = vmatmul.mubr.f32.gmra.mxu0 %v50
    %v188 = vpop.f32.mrf.mxu0
    %v189 = vadd.f32 0.0, %v188
    %v190 = vpop.f32.mrf.mxu0
    %191 = vmatprep.mubr.f32.mxu0 0.0
    %192 = vmatmul.mubr.f32.gmra.mxu0 %v51
    %v193 = vpop.f32.mrf.mxu0
    %v194 = vadd.f32 0.0, %v193
    %v195 = vpop.f32.mrf.mxu0
    %196 = vmatprep.mubr.f32.mxu0 0.0
    %197 = vmatmul.mubr.f32.gmra.mxu0 %v52
    %v198 = vpop.f32.mrf.mxu0
    %v199 = vadd.f32 0.0, %v198
    %v200 = vpop.f32.mrf.mxu0
    %201 = vmatprep.mubr.f32.mxu0 0.0
    %202 = vmatmul.mubr.f32.gmra.mxu0 %v53
    %v203 = vpop.f32.mrf.mxu0
    %v204 = vadd.f32 0.0, %v203
    %v205 = vpop.f32.mrf.mxu0
    %206 = vmatprep.mubr.f32.mxu0 0.0
    %207 = vmatmul.mubr.f32.gmra.mxu0 %v54
    %v208 = vpop.f32.mrf.mxu0
    %v209 = vadd.f32 0.0, %v208
    %v210 = vpop.f32.mrf.mxu0
    %211 = vmatprep.mubr.f32.mxu0 0.0
    %212 = vmatmul.mubr.f32.gmra.mxu0 %v55
    %v213 = vpop.f32.mrf.mxu0
    %v214 = vadd.f32 0.0, %v213
    %v215 = vpop.f32.mrf.mxu0
    %216 = vdwg.mxu0
    %217 = vst [vmem:[#allocation7] sm:$0xff] %v139
    %218 = vst [vmem:[#allocation7 + $0x8] sm:$0xff] %v144
    %219 = vst [vmem:[#allocation7 + $0x10] sm:$0xff] %v149
    %220 = vst [vmem:[#allocation7 + $0x18] sm:$0xff] %v154
    %221 = vst [vmem:[#allocation7 + $0x20] sm:$0xff] %v159
    %222 = vst [vmem:[#allocation7 + $0x28] sm:$0xff] %v164
    %223 = vst [vmem:[#allocation7 + $0x30] sm:$0xff] %v169
    %224 = vst [vmem:[#allocation7 + $0x38] sm:$0xff] %v174
    %225 = vst [vmem:[#allocation7 + $0x40] sm:$0xff] %v179
    %226 = vst [vmem:[#allocation7 + $0x48] sm:$0xff] %v184
    %227 = vst [vmem:[#allocation7 + $0x50] sm:$0xff] %v189
    %228 = vst [vmem:[#allocation7 + $0x58] sm:$0xff] %v194
    %229 = vst [vmem:[#allocation7 + $0x60] sm:$0xff] %v199
    %230 = vst [vmem:[#allocation7 + $0x68] sm:$0xff] %v204
    %231 = vst [vmem:[#allocation7 + $0x70] sm:$0xff] %v209
    %232 = vst [vmem:[#allocation7 + $0x78] sm:$0xff] %v214
    // Predicated region
    $region18: #{tpu_custom_call.1} parent=1 // pred_check
      _
    $region19: #{tpu_custom_call.1} parent=1 // pred_check_branch
      %234 = sbr.rel (0) target = $region21
    $region20: #{tpu_custom_call.1} parent=1 // pred_region
      %s236 = ssub.s32 2048, 2048
      %237 = vsyncadd [#allocation4], %s236
      %s238 = sshll.u32 [#allocation7], 4
      %s239 = int_to_ptr.vmem [resolvable:$true] %s238
      %244 = dma.vmem_to_hbm [thread:$0]  %s239, 2048, %s2, [#allocation4], 128, 128, 8
    $region21: #{tpu_custom_call.1} parent=1 // pred_fallthru
      _
    // Predicated region
    $region22: #{tpu_custom_call.1} parent=1 // pred_check
      _
    $region23: #{tpu_custom_call.1} parent=1 // pred_check_branch
      %246 = sbr.rel (0) target = $region25
    $region24: #{tpu_custom_call.1} parent=1 // pred_region
      %247 = dma.done [#allocation4], 2048
    $region25: #{tpu_custom_call.1} parent=1 // pred_fallthru
      _
    %248 = vsyncpa [#allocation3], 1
    %249 = vsyncpa [#allocation6], 1
    %250 = vsyncpa [#allocation4], 1

</llo_original>
